<compile_context>
chip_gen: v7x
topology: tpu7x:2x2x1
jax: 0.10.0
libtpu: 0.0.40
codegen_flags: <defaults>
</compile_context>

<pallas_src>
import functools

import jax
import jax.numpy as jnp
from jax.experimental import pallas as pl
from jax.experimental.pallas import tpu as pltpu


def _rmsnorm_kernel(x_ref, w1_ref, o_ref, *, eps, inv_dims):
    """One (tile_rows, dims_p) tile of RMSNorm.

    x_ref  : (tile_rows, dims_p)  input tile (any float dtype)
    w1_ref : (1, dims_p)          precomputed (1 + weight) in float32
    o_ref  : (tile_rows, dims_p)  output tile (same dtype as x)
    """
    x = x_ref[...].astype(jnp.float32)              # x.float()
    # Sum of squares over lanes scaled by 1/true_dims (padded lanes are zero,
    # so the padding does not perturb the mean).
    ms = jnp.sum(x * x, axis=-1, keepdims=True) * inv_dims
    inv = jax.lax.rsqrt(ms + eps)                   # EUP rsqrt (free slot)
    o_ref[...] = (x * inv * w1_ref[...]).astype(o_ref.dtype)


def _round_up(a, b):
    return ((a + b - 1) // b) * b


def _vmem_capacity_bytes():
    try:
        return int(pltpu.get_tpu_info().vmem_capacity_bytes)
    except Exception:
        # Conservative fallback = v7x per-TensorCore VMEM.
        return 64 * 1024 * 1024


def _pick_tile_rows(rows, dims_p, dtype, vmem_bytes):
    itemsize = jnp.dtype(dtype).itemsize
    # Sublane packing: 8 rows/vreg for f32, 16 for bf16, 32 for 8-bit dtypes.
    pack = max(8, 256 // (itemsize * 8))
    # Spend ~1/4 of VMEM on the double-buffered x/out tiles (the rest is left
    # for f32 intermediates, the weight block and compiler scratch).
    budget = vmem_bytes // 4
    bytes_per_row = 2 * 2 * dims_p * itemsize       # (in + out) * double-buffer
    tile = budget // max(bytes_per_row, 1)
    tile = max(pack, min(tile, 1024))
    tile = (tile // pack) * pack
    # Don't tile past the (row-padded) problem size for small inputs.
    tile = min(tile, _round_up(rows, pack))
    return max(tile, pack)


def rmsnorm(x, weight, eps: float = 1e-5, tile_rows=None):
    """Apply Gemma2 RMSNorm over the last axis of x.

    x:      (..., dims) array (any float dtype).
    weight: (dims,) parameter.
    """
    orig_shape = x.shape
    dims = orig_shape[-1]
    rows = 1
    for s in orig_shape[:-1]:
        rows *= s

    itemsize = jnp.dtype(x.dtype).itemsize
    vmem_bytes = _vmem_capacity_bytes()

    # Lane-dense layout: pad the reduction axis to a multiple of 128.
    dims_p = _round_up(dims, 128)

    x2d = x.reshape(rows, dims)
    # Hoist (1 + weight) out of the hot loop; computed once in f32.
    w1 = (1.0 + weight.astype(jnp.float32)).reshape(1, dims)
    if dims_p != dims:
        x2d = jnp.pad(x2d, ((0, 0), (0, dims_p - dims)))
        w1 = jnp.pad(w1, ((0, 0), (0, dims_p - dims)))

    if tile_rows is None:
        tile = _pick_tile_rows(rows, dims_p, x.dtype, vmem_bytes)
    else:
        tile = int(tile_rows)

    # Pad rows up to the tile instead of forcing a small divisor tile.
    rows_p = _round_up(rows, tile)
    if rows_p != rows:
        x2d = jnp.pad(x2d, ((0, rows_p - rows), (0, 0)))

    grid = (rows_p // tile,)

    # Size the scoped VMEM limit to what the pipeline actually needs
    # (double-buffered in/out tiles + f32 intermediates + weight) with headroom,
    # capped below the physical capacity of the current generation.
    buf_bytes = 2 * 2 * tile * dims_p * itemsize      # in+out, double-buffered
    tmp_bytes = 2 * tile * dims_p * 4                 # f32 intermediates
    needed = buf_bytes + tmp_bytes + 2 * dims_p * 4
    vmem_limit = int(min(vmem_bytes * 3 // 4,
                         max(needed + (8 << 20), 32 << 20)))

    kernel = functools.partial(_rmsnorm_kernel, eps=eps, inv_dims=1.0 / dims)

    out2d = pl.pallas_call(
        kernel,
        out_shape=jax.ShapeDtypeStruct((rows_p, dims_p), x.dtype),
        grid_spec=pltpu.PrefetchScalarGridSpec(
            num_scalar_prefetch=0,
            grid=grid,
            in_specs=[
                # x tile: (tile, dims_p), marches down the row axis.
                pl.BlockSpec((tile, dims_p), lambda i: (i, 0)),
                # (1 + weight): same full (1, dims_p) block every grid step.
                pl.BlockSpec((1, dims_p), lambda i: (0, 0)),
            ],
            out_specs=pl.BlockSpec((tile, dims_p), lambda i: (i, 0)),
        ),
        compiler_params=pltpu.CompilerParams(
            dimension_semantics=("parallel",),   # shards rows across both TCs on v7x
            vmem_limit_bytes=vmem_limit,
        ),
    )(x2d, w1)

    # Strip row/lane padding (no-op when shapes were already aligned).
    out2d = out2d[:rows, :dims]
    return out2d.reshape(orig_shape)


def rmsnorm_ref(x, weight, eps: float = 1e-5):
    xf = x.astype(jnp.float32)
    inv = jax.lax.rsqrt(jnp.mean(xf * xf, axis=-1, keepdims=True) + eps)
    out = xf * inv * (1.0 + weight.astype(jnp.float32))
    return out.astype(x.dtype)


if __name__ == "__main__":
    key = jax.random.PRNGKey(0)
    k1, k2 = jax.random.split(key)

    # Case 1: lane-aligned embedding dim (multiple of 128), bf16 activations.
    batch, seq, dims = 2, 8, 128
    x1 = jax.random.normal(k1, (batch, seq, dims), dtype=jnp.float32).astype(
        jnp.bfloat16
    )
    w1 = jnp.ones((dims,), dtype=jnp.float32) + 0.01 * jnp.arange(
        dims, dtype=jnp.float32
    )
    out1 = jax.block_until_ready(rmsnorm(x1, w1, eps=1e-5))
    ref1 = rmsnorm_ref(x1, w1, eps=1e-5)
    assert out1.shape == x1.shape and out1.dtype == x1.dtype
    assert jnp.allclose(
        out1.astype(jnp.float32), ref1.astype(jnp.float32), atol=2e-2, rtol=2e-2
    ), "Pallas RMSNorm mismatch vs reference (bf16, dims=128)"

    # Case 2: small non-128-aligned dim (exercises the lane-padding path), f32.
    batch, seq, dims = 2, 8, 32
    x2 = jax.random.normal(k2, (batch, seq, dims), dtype=jnp.float32)
    w2 = jnp.ones((dims,), dtype=jnp.float32) + 0.01 * jnp.arange(
        dims, dtype=jnp.float32
    )
    out2 = jax.block_until_ready(rmsnorm(x2, w2, eps=1e-5))
    ref2 = rmsnorm_ref(x2, w2, eps=1e-5)
    assert out2.shape == x2.shape and out2.dtype == x2.dtype
    assert jnp.allclose(out2, ref2, atol=1e-4, rtol=1e-5), \
        "Pallas RMSNorm mismatch vs reference (f32, dims=32)"

    print("KERNEL_OK")
</pallas_src>

<mosaic_0001>
module attributes {stable_mosaic.version = 11 : i64} {
  func.func @_rmsnorm_kernel(%arg0: i32, %arg1: memref<16x128xbf16, #tpu.memory_space<vmem>>, %arg2: memref<1x128xf32, #tpu.memory_space<vmem>>, %arg3: memref<16x128xbf16, #tpu.memory_space<vmem>>) attributes {dimension_semantics = [#tpu.dimension_semantics<parallel>], iteration_bounds = array<i64: 1>, scalar_prefetch = 0 : i64, scratch_operands = 0 : i64, tpu.core_type = #tpu.core_type<tc>, window_params = [{transform_indices = @transform_0, window_bounds = array<i64: 16, 128>}, {pipeline_mode = #tpu.pipeline_mode<synchronous>, transform_indices = @transform_1, window_bounds = array<i64: 1, 128>}, {transform_indices = @transform_2, window_bounds = array<i64: 16, 128>}]} {
    %c0 = arith.constant 0 : index
    %c0_0 = arith.constant 0 : index
    %0 = vector.load %arg1[%c0, %c0_0] : memref<16x128xbf16, #tpu.memory_space<vmem>>, vector<16x128xbf16>
    %1 = arith.extf %0 : vector<16x128xbf16> to vector<16x128xf32>
    %2 = arith.mulf %1, %1 : vector<16x128xf32>
    %cst = arith.constant dense<0.000000e+00> : vector<16xf32>
    %3 = vector.multi_reduction <add>, %2, %cst [1] : vector<16x128xf32> to vector<16xf32>
    %4 = vector.shape_cast %3 : vector<16xf32> to vector<16x1xf32>
    %cst_1 = arith.constant 7.812500e-03 : f32
    %5 = vector.broadcast %cst_1 : f32 to vector<16x1xf32>
    %6 = arith.mulf %4, %5 : vector<16x1xf32>
    %cst_2 = arith.constant 9.99999974E-6 : f32
    %7 = vector.broadcast %cst_2 : f32 to vector<16x1xf32>
    %8 = arith.addf %6, %7 : vector<16x1xf32>
    %9 = math.rsqrt %8 : vector<16x1xf32>
    %10 = vector.broadcast %9 : vector<16x1xf32> to vector<16x128xf32>
    %11 = arith.mulf %1, %10 : vector<16x128xf32>
    %c0_3 = arith.constant 0 : index
    %c0_4 = arith.constant 0 : index
    %12 = vector.load %arg2[%c0_3, %c0_4] : memref<1x128xf32, #tpu.memory_space<vmem>>, vector<1x128xf32>
    %13 = vector.broadcast %12 : vector<1x128xf32> to vector<16x128xf32>
    %14 = arith.mulf %11, %13 : vector<16x128xf32>
    %15 = arith.truncf %14 : vector<16x128xf32> to vector<16x128xbf16>
    %c0_5 = arith.constant 0 : index
    %c0_6 = arith.constant 0 : index
    %16 = vector.load %arg3[%c0_5, %c0_6] : memref<16x128xbf16, #tpu.memory_space<vmem>>, vector<16x128xbf16>
    tpu.vector_store %arg3[%c0_5, %c0_6], %15 {strides = array<i32>} : memref<16x128xbf16, #tpu.memory_space<vmem>>, vector<16x128xbf16>,
    return
  }
  func.func @transform_0(%arg0: i32) -> (i32, i32) {
    %c0_i32 = arith.constant 0 : i32
    %c0_i32_0 = arith.constant 0 : i32
    return %arg0, %c0_i32 : i32, i32
  }
  func.func @transform_1(%arg0: i32) -> (i32, i32) {
    %c0_i32 = arith.constant 0 : i32
    %c0_i32_0 = arith.constant 0 : i32
    %c0_i32_1 = arith.constant 0 : i32
    return %c0_i32, %c0_i32_0 : i32, i32
  }
  func.func @transform_2(%arg0: i32) -> (i32, i32) {
    %c0_i32 = arith.constant 0 : i32
    %c0_i32_0 = arith.constant 0 : i32
    return %arg0, %c0_i32 : i32, i32
  }
}

</mosaic_0001>

<llo_original>
// kernel: tpu_custom_call.1
$region0: #{tpu_custom_call.1}
  #allocation0 [shape = 'u32[]', space=smem, size = 0x4, offset = 0x4, fixed_abs, tag = 'smem constant byte address 0x4 - core index']
  #allocation1 [shape = 'u32[144,128]{1,0:T(1,128)}', space=vmem, size = 0x12000, scoped, tag = 'internal scratch']
  %s0 = inlined_call_operand.hbm [shape: bf16[16,128], index: 0, kind: input, shape index: {}]
  %s1 = inlined_call_operand.vmem [shape: f32[1,128], index: 1, kind: input, shape index: {}]
  %s2 = inlined_call_operand.hbm [shape: bf16[16,128], index: 2, kind: output, shape index: {}]
  %s3 = sld [smem:[#allocation0]]
  $region22: #{tpu_custom_call.1} parent=0
    _
  %s5 = ssub.s32 1, %s3
  %s6 = scalar_select 0, %s5, %s3
  $region1: #{tpu_custom_call.1} parent=0
    #allocation2 [shape = 'u8[4096]{0}', space=vmem, size = 0x1000, scoped, tag = 'input window, operand 0, single buffered']
    #allocation3 [shape = 's32[1]{0}', space=sflag, size = 0x4, scoped, tag = 'scoped memory for tpu_custom_call.1']
    #allocation4 [shape = 's32[1]{0}', space=sflag, size = 0x4, scoped, tag = 'scoped memory for tpu_custom_call.1']
    #allocation5 [shape = 'u8[4096]{0}', space=vmem, size = 0x1000, scoped, tag = 'output window, operand 0, single buffered']
    %7 = vsyncpa [#allocation3], 0
    %8 = vsyncpa [#allocation4], 0
    // Predicated region
    $region2: #{tpu_custom_call.1} parent=1 // pred_check
      _
    $region3: #{tpu_custom_call.1} parent=1 // pred_check_branch
      %10 = sbr.rel (0) target = $region5
    $region4: #{tpu_custom_call.1} parent=1 // pred_region
      %s12 = ssub.s32 128, 128
      %13 = vsyncadd [#allocation3], %s12
      %s14 = sshll.u32 [#allocation2], 4
      %s15 = int_to_ptr.vmem [resolvable:$true] %s14
      %20 = dma.hbm_to_vmem [thread:$0]  %s0, 128, %s15, [#allocation3], 64, 64, 4
    $region5: #{tpu_custom_call.1} parent=1 // pred_fallthru
      _
    // Predicated region
    $region6: #{tpu_custom_call.1} parent=1 // pred_check
      _
    $region7: #{tpu_custom_call.1} parent=1 // pred_check_branch
      %22 = sbr.rel (0) target = $region9
    $region8: #{tpu_custom_call.1} parent=1 // pred_region
      _
    $region9: #{tpu_custom_call.1} parent=1 // pred_fallthru
      _
    // Predicated region
    $region10: #{tpu_custom_call.1} parent=1 // pred_check
      _
    $region11: #{tpu_custom_call.1} parent=1 // pred_check_branch
      %24 = sbr.rel (0) target = $region13
    $region12: #{tpu_custom_call.1} parent=1 // pred_region
      %25 = dma.done [#allocation3], 128
    $region13: #{tpu_custom_call.1} parent=1 // pred_fallthru
      _
    %v26 = vld [vmem:[#allocation2] sm:$0xf]
    %v27 = vld [vmem:[#allocation2 + $0x4] sm:$0xf]
    %v28 = vunpack.c.l.bf16 %v26
    %v29 = vunpack.c.l.bf16 %v27
    %v30 = vmul.f32 %v28, %v28
    %v31 = vmul.f32 %v29, %v29
    %32 = vadd.xlane.f32.xlu0 %v30
    %v33 = vpop.xlane.xlu0 %32
    %34 = vadd.xlane.f32.xlu0 %v31
    %v35 = vpop.xlane.xlu0 %34
    %v36 = vmul.f32 %v33, 0.0078125
    %v37 = vmul.f32 %v35, 0.0078125
    %v38 = vadd.f32 %v36, 1e-05
    %v39 = vadd.f32 %v37, 1e-05
    %v40 = vrsqrt.pop %v38
    %v41 = vrsqrt.pop %v39
    %v42 = vmul.f32 %v28, %v40
    %v43 = vmul.f32 %v29, %v41
    %v44 = vld [vmem:[%s1] sm:$0x1]
    %v46 = vlaneseq
    %v47 = vshrl.u32 %v46, 7
    %v48 = vsub.s32 0, %v47
    %v49 = vrot.slane %v44, %v48
    %v51 = vmul.f32 %v42, %v49
    %v52 = vmul.f32 %v43, %v49
    %v53 = vpack.c.bf16 %v52, %v51
    %v55 = vunpack.c.l.b16 %v53
    %v56 = vunpack.c.h.b16 %v53
    %v57 = vpack.c.b16 %v55, %v55
    %v58 = vpack.c.b16 %v56, %v56
    %61 = vst [vmem:[#allocation5] sm:$0xf] %v57
    %62 = vst [vmem:[#allocation5 + $0x4] sm:$0xf] %v58
    // Predicated region
    $region14: #{tpu_custom_call.1} parent=1 // pred_check
      _
    $region15: #{tpu_custom_call.1} parent=1 // pred_check_branch
      %64 = sbr.rel (0) target = $region17
    $region16: #{tpu_custom_call.1} parent=1 // pred_region
      %s66 = ssub.s32 128, 128
      %67 = vsyncadd [#allocation4], %s66
      %s68 = sshll.u32 [#allocation5], 4
      %s69 = int_to_ptr.vmem [resolvable:$true] %s68
      %74 = dma.vmem_to_hbm [thread:$0]  %s69, 128, %s2, [#allocation4], 64, 64, 4
    $region17: #{tpu_custom_call.1} parent=1 // pred_fallthru
      _
    // Predicated region
    $region18: #{tpu_custom_call.1} parent=1 // pred_check
      _
    $region19: #{tpu_custom_call.1} parent=1 // pred_check_branch
      %76 = sbr.rel (0) target = $region21
    $region20: #{tpu_custom_call.1} parent=1 // pred_region
      %77 = dma.done [#allocation4], 128
    $region21: #{tpu_custom_call.1} parent=1 // pred_fallthru
      _
    %78 = vsyncpa [#allocation3], 1
    %79 = vsyncpa [#allocation4], 1

</llo_original>
